<compile_context>
chip_gen: v7x
topology: tpu7x:2x2x1
jax: 0.10.0
libtpu: 0.0.40
codegen_flags: <defaults>
</compile_context>

<pallas_src>
import jax
import jax.numpy as jnp
from jax import lax
from jax.experimental import pallas as pl
from jax.experimental.pallas import tpu as pltpu

MIB = 1024 * 1024


def se_kernel(x_ref, w1_ref, w2_ref, o_ref):
    # x block: (Bt, C, HW); w1: (Cr, C); w2: (C, Cr)  -- PyTorch Linear layout.
    inv_hw = jnp.float32(1.0 / x_ref.shape[-1])

    # --- squeeze: spatial mean with f32 accumulation.  The cast feeds the
    # reduction directly; no full-tile f32 copy stays live past this line. ---
    y = jnp.sum(x_ref[...].astype(jnp.float32), axis=-1) * inv_hw      # (Bt, C)

    # --- excitation: FC1 -> ReLU -> FC2 -> sigmoid, all in f32 ---
    # h[b, r] = sum_c y[b, c] * w1[r, c]
    h = lax.dot_general(y, w1_ref[...].astype(jnp.float32),
                        (((1,), (1,)), ((), ())),
                        preferred_element_type=jnp.float32)             # (Bt, Cr)
    h = jnp.maximum(h, 0.0)
    # s[b, c] = sum_r h[b, r] * w2[c, r]
    s = lax.dot_general(h, w2_ref[...].astype(jnp.float32),
                        (((1,), (1,)), ((), ())),
                        preferred_element_type=jnp.float32)             # (Bt, C)
    s = jax.nn.sigmoid(s)

    # --- scale: re-read the VMEM-resident input block (free) and multiply in
    # the activation dtype -- no full-tile f32 materialization. ---
    o_ref[...] = (x_ref[...] * s[:, :, None].astype(x_ref.dtype)).astype(o_ref.dtype)


def _vmem_config():
    """Generation-aware (live_budget_bytes, vmem_limit_bytes, min_grid_steps)."""
    kind = ""
    try:
        kind = jax.devices()[0].device_kind.lower()
    except Exception:
        pass
    vmem_cap = None
    try:
        vmem_cap = int(pltpu.get_tpu_info().vmem_capacity_bytes)
    except Exception:
        vmem_cap = None

    big_vmem = (vmem_cap is not None and vmem_cap >= 96 * MIB) or \
               ("v5" in kind) or ("v6" in kind)
    if "v7" in kind:
        big_vmem = False  # 64 MiB per TensorCore on v7x; budgets are per-TC.

    if big_vmem:           # v5e / v6e: 128 MiB physical VMEM per core
        return 56 * MIB, 80 * MIB, 2
    # v7x (or unknown -> conservative, safe on every generation)
    return 32 * MIB, 48 * MIB, 4


def se_block(x, w1, w2, *, batch_tile=None):
    """x: (B, C, H, W); w1: (C//r, C); w2: (C, C//r) -- PyTorch Linear layout."""
    B, C, H, W = x.shape
    HW = H * W
    Cr = w1.shape[0]
    assert w1.shape == (Cr, C) and w2.shape == (C, Cr)

    x_flat = x.reshape(B, C, HW)  # contiguous reshape: no data movement

    itemsize = jnp.dtype(x.dtype).itemsize
    per_batch_bytes = C * HW * itemsize
    w_bytes = (w1.size * jnp.dtype(w1.dtype).itemsize
               + w2.size * jnp.dtype(w2.dtype).itemsize)

    budget, vmem_limit, min_steps = _vmem_config()
    # Live VMEM ~= double-buffered input + output tiles (4x tile bytes) plus
    # the grid-resident (possibly double-buffered) weights and ~1 MiB headroom.
    io_budget = budget - 2 * w_bytes - 1 * MIB
    if 4 * per_batch_bytes > io_budget:
        # TODO(synk): add a second-level spatial tiling (two-pass pool + scale)
        # for feature maps too large for a single-batch VMEM tile.
        raise ValueError(
            f"one batch element needs {4 * per_batch_bytes} B of buffered VMEM "
            f"but only {io_budget} B are budgeted; spatial tiling not implemented")

    if batch_tile is None:
        bt = max(1, io_budget // (4 * per_batch_bytes))
        # Keep >= min_steps grid steps (>= 2 per TensorCore on v7x) so the
        # "parallel" axis shards across cores and the pipeline overlaps.
        bt = min(bt, B // min_steps) if B >= min_steps else 1
    else:
        bt = max(1, min(int(batch_tile), B))
    bt = min(bt, B)
    grid = (pl.cdiv(B, bt),)   # partial last tile allowed (masked writes)

    # Layout note: HW sits on the lane axis.  When HW % 128 == 0 (e.g. 16x16)
    # stores are full, unmasked lane-dense writes.  Other spatial sizes
    # (7x7=49, 14x14=196, ...) remain correct but use masked partial stores.
    # TODO(synk): add a lane-dense (B, C*HW)-slab layout (pool via in-tile
    # reshape) so HW % 128 != 0 feature maps also get unmasked stores.

    cost = pl.CostEstimate(
        flops=2 * B * C * HW + 4 * B * C * Cr,
        transcendentals=B * C,
        bytes_accessed=2 * B * C * HW * itemsize + w_bytes,
    )

    out_flat = pl.pallas_call(
        se_kernel,
        out_shape=jax.ShapeDtypeStruct((B, C, HW), x.dtype),
        grid_spec=pltpu.PrefetchScalarGridSpec(
            num_scalar_prefetch=0,
            grid=grid,
            in_specs=[
                pl.BlockSpec((bt, C, HW), lambda b: (b, 0, 0)),
                pl.BlockSpec((Cr, C), lambda b: (0, 0)),   # weights stay VMEM-
                pl.BlockSpec((C, Cr), lambda b: (0, 0)),   # resident over the grid
            ],
            out_specs=pl.BlockSpec((bt, C, HW), lambda b: (b, 0, 0)),
        ),
        compiler_params=pltpu.CompilerParams(
            dimension_semantics=("parallel",),
            vmem_limit_bytes=vmem_limit,
        ),
        cost_estimate=cost,
    )(x_flat, w1, w2)
    return out_flat.reshape(B, C, H, W)


def se_block_ref(x, w1, w2):
    """Pure-JAX reference identical to the PyTorch forward."""
    xf = x.astype(jnp.float32)
    y = jnp.mean(xf, axis=(2, 3))                              # (B, C)
    y = jnp.maximum(y @ w1.astype(jnp.float32).T, 0.0)         # (B, C//r)
    y = jax.nn.sigmoid(y @ w2.astype(jnp.float32).T)           # (B, C)
    return (xf * y[:, :, None, None]).astype(x.dtype)


def _check(x, w1, w2, tol, **kw):
    out = jax.block_until_ready(se_block(x, w1, w2, **kw))
    ref = se_block_ref(x, w1, w2)
    assert out.shape == x.shape and out.dtype == x.dtype
    assert jnp.allclose(out.astype(jnp.float32), ref.astype(jnp.float32),
                        atol=tol, rtol=tol), "mismatch vs reference"


if __name__ == "__main__":
    C, r = 32, 16
    Cr = C // r  # 2

    key = jax.random.PRNGKey(0)
    kx, k1, k2, kx2, kx3 = jax.random.split(key, 5)
    # nn.Linear weight shapes: fc1 (C//r, C), fc2 (C, C//r); bias-free.
    w1 = jax.random.normal(k1, (Cr, C), dtype=jnp.float32) * (1.0 / jnp.sqrt(C))
    w2 = jax.random.normal(k2, (C, Cr), dtype=jnp.float32) * (1.0 / jnp.sqrt(Cr))

    # 1) main path: f32 activations, HW a multiple of 128 (lane-dense stores)
    x = jax.random.normal(kx, (2, C, 16, 16), dtype=jnp.float32)
    _check(x, w1, w2, 1e-5)

    # 2) bf16 activations (halved HBM traffic; f32 accumulation inside)
    xb = jax.random.normal(kx2, (2, C, 16, 16), dtype=jnp.bfloat16)
    _check(xb, w1, w2, 5e-2)

    # 3) non-divisor batch tile (partial last grid step) + realistic 7x7
    #    spatial size (HW=49, masked-store fallback)
    x3 = jax.random.normal(kx3, (3, C, 7, 7), dtype=jnp.float32)
    _check(x3, w1, w2, 1e-5, batch_tile=2)

    print("KERNEL_OK")
</pallas_src>

<mosaic_0001>
module attributes {stable_mosaic.version = 11 : i64} {
  func.func @se_kernel(%arg0: i32, %arg1: memref<1x32x256xf32, #tpu.memory_space<vmem>>, %arg2: memref<2x32xf32, #tpu.memory_space<vmem>>, %arg3: memref<32x2xf32, #tpu.memory_space<vmem>>, %arg4: memref<1x32x256xf32, #tpu.memory_space<vmem>>) attributes {dimension_semantics = [#tpu.dimension_semantics<parallel>], iteration_bounds = array<i64: 2>, scalar_prefetch = 0 : i64, scratch_operands = 0 : i64, tpu.core_type = #tpu.core_type<tc>, window_params = [{transform_indices = @transform_0, window_bounds = array<i64: 1, 32, 256>}, {pipeline_mode = #tpu.pipeline_mode<synchronous>, transform_indices = @transform_1, window_bounds = array<i64: 2, 32>}, {pipeline_mode = #tpu.pipeline_mode<synchronous>, transform_indices = @transform_2, window_bounds = array<i64: 32, 2>}, {transform_indices = @transform_3, window_bounds = array<i64: 1, 32, 256>}]} {
    %c0 = arith.constant 0 : index
    %c0_0 = arith.constant 0 : index
    %c0_1 = arith.constant 0 : index
    %0 = vector.load %arg1[%c0, %c0_0, %c0_1] : memref<1x32x256xf32, #tpu.memory_space<vmem>>, vector<1x32x256xf32>
    %cst = arith.constant dense<0.000000e+00> : vector<1x32xf32>
    %1 = vector.multi_reduction <add>, %0, %cst [2] : vector<1x32x256xf32> to vector<1x32xf32>
    %cst_2 = arith.constant 3.906250e-03 : f32
    %2 = vector.broadcast %cst_2 : f32 to vector<1x32xf32>
    %3 = arith.mulf %1, %2 : vector<1x32xf32>
    %c0_3 = arith.constant 0 : index
    %c0_4 = arith.constant 0 : index
    %4 = vector.load %arg2[%c0_3, %c0_4] : memref<2x32xf32, #tpu.memory_space<vmem>>, vector<2x32xf32>
    %cst_5 = arith.constant dense<0.000000e+00> : vector<1x2xf32>
    %5 = tpu.matmul %3, %4, %cst_5 {dimension_numbers = #tpu.dot_dimension_numbers<[1], [1], [0], [0], [0, 0, 1, 0], [], []>} : vector<1x32xf32>, vector<2x32xf32>, vector<1x2xf32> -> vector<1x2xf32>
    %cst_6 = arith.constant 0.000000e+00 : f32
    %6 = vector.broadcast %cst_6 : f32 to vector<1x2xf32>
    %7 = arith.maximumf %5, %6 : vector<1x2xf32>
    %c0_7 = arith.constant 0 : index
    %c0_8 = arith.constant 0 : index
    %8 = vector.load %arg3[%c0_7, %c0_8] : memref<32x2xf32, #tpu.memory_space<vmem>>, vector<32x2xf32>
    %cst_9 = arith.constant dense<0.000000e+00> : vector<1x32xf32>
    %9 = tpu.matmul %7, %8, %cst_9 {dimension_numbers = #tpu.dot_dimension_numbers<[1], [1], [0], [0], [0, 0, 1, 0], [], []>} : vector<1x2xf32>, vector<32x2xf32>, vector<1x32xf32> -> vector<1x32xf32>
    %10 = arith.negf %9 : vector<1x32xf32>
    %11 = math.exp %10 : vector<1x32xf32>
    %cst_10 = arith.constant 1.000000e+00 : f32
    %12 = vector.broadcast %cst_10 : f32 to vector<1x32xf32>
    %13 = arith.addf %12, %11 : vector<1x32xf32>
    %14 = arith.divf %12, %13 : vector<1x32xf32>
    %c0_11 = arith.constant 0 : index
    %c0_12 = arith.constant 0 : index
    %c0_13 = arith.constant 0 : index
    %15 = vector.load %arg1[%c0_11, %c0_12, %c0_13] : memref<1x32x256xf32, #tpu.memory_space<vmem>>, vector<1x32x256xf32>
    %16 = vector.shape_cast %14 : vector<1x32xf32> to vector<1x32x1xf32>
    %17 = vector.broadcast %16 : vector<1x32x1xf32> to vector<1x32x256xf32>
    %18 = arith.mulf %15, %17 : vector<1x32x256xf32>
    %c0_14 = arith.constant 0 : index
    %c0_15 = arith.constant 0 : index
    %c0_16 = arith.constant 0 : index
    %19 = vector.load %arg4[%c0_14, %c0_15, %c0_16] : memref<1x32x256xf32, #tpu.memory_space<vmem>>, vector<1x32x256xf32>
    tpu.vector_store %arg4[%c0_14, %c0_15, %c0_16], %18 {strides = array<i32>} : memref<1x32x256xf32, #tpu.memory_space<vmem>>, vector<1x32x256xf32>,
    return
  }
  func.func @transform_0(%arg0: i32) -> (i32, i32, i32) {
    %c0_i32 = arith.constant 0 : i32
    %c0_i32_0 = arith.constant 0 : i32
    %c0_i32_1 = arith.constant 0 : i32
    return %arg0, %c0_i32, %c0_i32_0 : i32, i32, i32
  }
  func.func @transform_1(%arg0: i32) -> (i32, i32) {
    %c0_i32 = arith.constant 0 : i32
    %c0_i32_0 = arith.constant 0 : i32
    %c0_i32_1 = arith.constant 0 : i32
    return %c0_i32, %c0_i32_0 : i32, i32
  }
  func.func @transform_2(%arg0: i32) -> (i32, i32) {
    %c0_i32 = arith.constant 0 : i32
    %c0_i32_0 = arith.constant 0 : i32
    %c0_i32_1 = arith.constant 0 : i32
    return %c0_i32, %c0_i32_0 : i32, i32
  }
  func.func @transform_3(%arg0: i32) -> (i32, i32, i32) {
    %c0_i32 = arith.constant 0 : i32
    %c0_i32_0 = arith.constant 0 : i32
    %c0_i32_1 = arith.constant 0 : i32
    return %arg0, %c0_i32, %c0_i32_0 : i32, i32, i32
  }
}

</mosaic_0001>

<llo_original>
// kernel: tpu_custom_call.1
$region0: #{tpu_custom_call.1}
  #allocation0 [shape = 'u32[]', space=smem, size = 0x4, offset = 0x4, fixed_abs, tag = 'smem constant byte address 0x4 - core index']
  #allocation1 [shape = 'u32[144,128]{1,0:T(1,128)}', space=vmem, size = 0x12000, scoped, tag = 'internal scratch']
  %s0 = inlined_call_operand.hbm [shape: f32[2,32,256], index: 0, kind: input, shape index: {}]
  %s1 = inlined_call_operand.vmem [shape: f32[2,32], index: 1, kind: input, shape index: {}]
  %s2 = inlined_call_operand.vmem [shape: f32[32,2], index: 2, kind: input, shape index: {}]
  %s3 = inlined_call_operand.hbm [shape: f32[2,32,256], index: 3, kind: output, shape index: {}]
  %s4 = sld [smem:[#allocation0]]
  $region49: #{tpu_custom_call.1} parent=0
    _
  %s6 = ssub.s32 1, %s4
  %s7 = scalar_select 0, %s6, %s4
  $region1: #{tpu_custom_call.1} parent=0
    #allocation2 [shape = 'u8[65536]{0}', space=vmem, size = 0x10000, scoped, tag = 'input window, operand 0']
    #allocation3 [shape = 's32[2]{0}', space=sflag, size = 0x8, scoped, tag = 'scoped memory for tpu_custom_call.1']
    #allocation4 [shape = 's32[2]{0}', space=sflag, size = 0x8, scoped, tag = 'scoped memory for tpu_custom_call.1']
    #allocation5 [shape = 'u8[65536]{0}', space=vmem, size = 0x10000, scoped, tag = 'output window, operand 0']
    %8 = vsyncpa [#allocation3], 0
    %s9 = scalar_lea.sflag [#allocation3], 1
    %10 = vsyncpa %s9, 0
    %11 = vsyncpa [#allocation4], 0
    %s12 = scalar_lea.sflag [#allocation4], 1
    %13 = vsyncpa %s12, 0
    loop: start=0, step=1, limit=4
    $region2: #{tpu_custom_call.1} parent=1 // loop_pre_header
      _
    $region3: #{tpu_custom_call.1} parent=1 // loop_header
      %s15 = sphi 0, %s19
      %p16 = scmp.ge.s32.totalorder %s15, 4
      %s25 = sphi 0, %s27
      %s28 = sphi 0, %s25
      %s29 = sphi 0, %s28
      %s45 = sphi 0, %s29
      %s49 = sphi 0, %s49
      %s51 = sphi 0, %s49
      %s52 = sphi 0, %s51
      %s66 = sphi 0, %s52
      %s70 = sphi 0, %s70
      %s72 = sphi 0, %s70
      %s73 = sphi 0, %s72
      %s87 = sphi 0, %s73
      %s93 = sphi 0, %s95
      %s96 = sphi 0, %s93
      %s97 = sphi 0, %s96
      %s113 = sphi 0, %s97
    $region4: #{tpu_custom_call.1} parent=1 // loop_header_branch
      %18 = sbr.rel (%p16) target = $region8
    $region5: #{tpu_custom_call.1} parent=1 // loop_body
      %s20 = ssub.s32 %s15, 1
      %s21 = ssub.s32 %s15, 2
      %s22 = sadd.s32 %s15, 1
      %s23 = ssub.s32 %s15, %s22
      %p24 = scmp.eq.s32.totalorder %s23, 0
      %s26 = sadd.s32 %s25, 1
      %s27 = scalar_select %p24, %s25, %s26
      %p30 = pneg %p24
      %p31 = scmp.eq.s32.totalorder %s15, 1
      %p32 = por %p30, %p31
      %p33 = scmp.ne.s32.totalorder %s25, %s28
      %p34 = scmp.eq.s32.totalorder %s15, 0
      %p35 = por %p33, %p34
      %p36 = scmp.ne.s32.totalorder %s25, %s28
      %p37 = scmp.eq.s32.totalorder %s20, 1
      %p38 = por %p36, %p37
      %p39 = scmp.ne.s32.totalorder %s28, %s29
      %p40 = scmp.eq.s32.totalorder %s20, 0
      %p41 = por %p39, %p40
      %p42 = scmp.ne.s32.totalorder %s28, %s29
      %p43 = scmp.eq.s32.totalorder %s21, 1
      %p44 = por %p42, %p43
      %p46 = scmp.ne.s32.totalorder %s29, %s45
      %p47 = scmp.eq.s32.totalorder %s21, 0
      %p48 = por %p46, %p47
      %s50 = sadd.s32 %s49, 1
      %p53 = scmp.eq.s32.totalorder %s15, 1
      %p54 = scmp.ne.s32.totalorder %s49, %s51
      %p55 = scmp.eq.s32.totalorder %s15, 0
      %p56 = por %p54, %p55
      %p57 = scmp.ne.s32.totalorder %s49, %s51
      %p58 = scmp.eq.s32.totalorder %s20, 1
      %p59 = por %p57, %p58
      %p60 = scmp.ne.s32.totalorder %s51, %s52
      %p61 = scmp.eq.s32.totalorder %s20, 0
      %p62 = por %p60, %p61
      %p63 = scmp.ne.s32.totalorder %s51, %s52
      %p64 = scmp.eq.s32.totalorder %s21, 1
      %p65 = por %p63, %p64
      %p67 = scmp.ne.s32.totalorder %s52, %s66
      %p68 = scmp.eq.s32.totalorder %s21, 0
      %p69 = por %p67, %p68
      %s71 = sadd.s32 %s70, 1
      %p74 = scmp.eq.s32.totalorder %s15, 1
      %p75 = scmp.ne.s32.totalorder %s70, %s72
      %p76 = scmp.eq.s32.totalorder %s15, 0
      %p77 = por %p75, %p76
      %p78 = scmp.ne.s32.totalorder %s70, %s72
      %p79 = scmp.eq.s32.totalorder %s20, 1
      %p80 = por %p78, %p79
      %p81 = scmp.ne.s32.totalorder %s72, %s73
      %p82 = scmp.eq.s32.totalorder %s20, 0
      %p83 = por %p81, %p82
      %p84 = scmp.ne.s32.totalorder %s72, %s73
      %p85 = scmp.eq.s32.totalorder %s21, 1
      %p86 = por %p84, %p85
      %p88 = scmp.ne.s32.totalorder %s73, %s87
      %p89 = scmp.eq.s32.totalorder %s21, 0
      %p90 = por %p88, %p89
      %s91 = ssub.s32 %s15, %s22
      %p92 = scmp.eq.s32.totalorder %s91, 0
      %s94 = sadd.s32 %s93, 1
      %s95 = scalar_select %p92, %s93, %s94
      %p98 = pneg %p92
      %p99 = scmp.eq.s32.totalorder %s15, 1
      %p100 = por %p98, %p99
      %p101 = scmp.ne.s32.totalorder %s93, %s96
      %p102 = scmp.eq.s32.totalorder %s15, 0
      %p103 = por %p101, %p102
      %p104 = scmp.ne.s32.totalorder %s93, %s96
      %p105 = scmp.eq.s32.totalorder %s20, 1
      %p106 = por %p104, %p105
      %p107 = scmp.ne.s32.totalorder %s96, %s97
      %p108 = scmp.eq.s32.totalorder %s20, 0
      %p109 = por %p107, %p108
      %p110 = scmp.ne.s32.totalorder %s96, %s97
      %p111 = scmp.eq.s32.totalorder %s21, 1
      %p112 = por %p110, %p111
      %p114 = scmp.ne.s32.totalorder %s97, %s113
      %p115 = scmp.eq.s32.totalorder %s21, 0
      %p116 = por %p114, %p115
      %p117 = scmp.le.s32.totalorder 1, %s15
      %p118 = scmp.lt.s32.totalorder %s15, 3
      %p119 = pnand %p117, %p118
      %p120 = pneg %p119
      // Predicated region
      $region9: #{tpu_custom_call.1} parent=5 // pred_check
        _
      $region10: #{tpu_custom_call.1} parent=5 // pred_check_branch
        %122 = sbr.rel (%p119) target = $region12
      $region11: #{tpu_custom_call.1} parent=5 // pred_region
        %s123 = ssub.s32 %s15, 1
        // Predicated region
        $region13: #{tpu_custom_call.1} parent=11 // pred_check
          %p124 = pneg %p62
        $region14: #{tpu_custom_call.1} parent=11 // pred_check_branch
          %126 = sbr.rel (%p124) target = $region16
        $region15: #{tpu_custom_call.1} parent=11 // pred_region
          _
        $region16: #{tpu_custom_call.1} parent=11 // pred_fallthru
          _
        // Predicated region
        $region17: #{tpu_custom_call.1} parent=11 // pred_check
          %p127 = pneg %p83
        $region18: #{tpu_custom_call.1} parent=11 // pred_check_branch
          %129 = sbr.rel (%p127) target = $region20
        $region19: #{tpu_custom_call.1} parent=11 // pred_region
          _
        $region20: #{tpu_custom_call.1} parent=11 // pred_fallthru
          _
      $region12: #{tpu_custom_call.1} parent=5 // pred_fallthru
        _
      %p130 = scmp.lt.s32.totalorder %s15, 2
      // Predicated region
      $region21: #{tpu_custom_call.1} parent=5 // pred_check
        %p131 = pneg %p130
      $region22: #{tpu_custom_call.1} parent=5 // pred_check_branch
        %133 = sbr.rel (%p131) target = $region24
      $region23: #{tpu_custom_call.1} parent=5 // pred_region
        // Predicated region
        $region25: #{tpu_custom_call.1} parent=23 // pred_check
          %p134 = pneg %p35
        $region26: #{tpu_custom_call.1} parent=23 // pred_check_branch
          %136 = sbr.rel (%p134) target = $region28
        $region27: #{tpu_custom_call.1} parent=23 // pred_region
          %s137 = sand.u32 %s25, 1
          %s138 = scalar_lea.sflag [#allocation3], %s137
          %s139 = sand.u32 %s25, 1
          %s140 = smul.addr %s139, 64
          %s141 = scalar_lea.vmem [#allocation2], %s140
          %s143 = ssub.s32 1024, 1024
          %144 = vsyncadd %s138, %s143
          %s145 = smul.addr %s15, 8
          %s146 = smul.addr %s145, 128
          %s147 = scalar_lea.hbm %s0, %s146
          %s148 = sshll.u32 %s141, 4
          %s149 = int_to_ptr.vmem [resolvable:$true] %s148
          %154 = dma.hbm_to_vmem [thread:$0]  %s147, 1024, %s149, %s138, 256, 256, 16
        $region28: #{tpu_custom_call.1} parent=23 // pred_fallthru
          _
      $region24: #{tpu_custom_call.1} parent=5 // pred_fallthru
        _
      %p155 = scmp.le.s32.totalorder 1, %s15
      %p156 = scmp.lt.s32.totalorder %s15, 3
      %p157 = pnand %p155, %p156
      %p158 = pneg %p157
      // Predicated region
      $region29: #{tpu_custom_call.1} parent=5 // pred_check
        _
      $region30: #{tpu_custom_call.1} parent=5 // pred_check_branch
        %160 = sbr.rel (%p157) target = $region32
      $region31: #{tpu_custom_call.1} parent=5 // pred_region
        %s161 = ssub.s32 %s15, 1
        %s162 = sand.u32 %s28, 1
        %s163 = scalar_lea.sflag [#allocation3], %s162
        %s164 = sand.u32 %s28, 1
        %s165 = smul.addr %s164, 64
        %s166 = scalar_lea.vmem [#allocation2], %s165
        // Predicated region
        $region33: #{tpu_custom_call.1} parent=31 // pred_check
          %p167 = pneg %p41
        $region34: #{tpu_custom_call.1} parent=31 // pred_check_branch
          %169 = sbr.rel (%p167) target = $region36
        $region35: #{tpu_custom_call.1} parent=31 // pred_region
          %170 = dma.done %s163, 1024
        $region36: #{tpu_custom_call.1} parent=31 // pred_fallthru
          _
        %s171 = sand.u32 %s28, 1
        %s172 = scalar_lea.sflag [#allocation3], %s171
        %s173 = sand.u32 %s28, 1
        %s174 = smul.addr %s173, 64
        %s175 = scalar_lea.vmem [#allocation2], %s174
        %p176 = pneg %p41
        %p177 = pneg %p38
        %p178 = pneg %p62
        %p179 = pneg %p59
        %p180 = pneg %p83
        %p181 = pneg %p80
        %p182 = pneg %p109
        %p183 = pneg %p106
        %s184 = sand.u32 %s96, 1
        %s185 = scalar_lea.sflag [#allocation4], %s184
        %s186 = sand.u32 %s96, 1
        %s187 = smul.addr %s186, 64
        %s188 = scalar_lea.vmem [#allocation5], %s187
        %v189 = vld [vmem:[%s166] sm:$0xff]
        %v190 = vld [vmem:[%s166 + $0x8] sm:$0xff]
        %v191 = vld [vmem:[%s166 + $0x10] sm:$0xff]
        %v192 = vld [vmem:[%s166 + $0x18] sm:$0xff]
        %v193 = vld [vmem:[%s166 + $0x20] sm:$0xff]
        %v194 = vld [vmem:[%s166 + $0x28] sm:$0xff]
        %v195 = vld [vmem:[%s166 + $0x30] sm:$0xff]
        %v196 = vld [vmem:[%s166 + $0x38] sm:$0xff]
        %v197 = vadd.f32 %v189, %v190
        %198 = vadd.xlane.f32.xlu0 %v197
        %v199 = vpop.xlane.xlu0 %198
        %v200 = vadd.f32 %v191, %v192
        %201 = vadd.xlane.f32.xlu0 %v200
        %v202 = vpop.xlane.xlu0 %201
        %v203 = vadd.f32 %v193, %v194
        %204 = vadd.xlane.f32.xlu0 %v203
        %v205 = vpop.xlane.xlu0 %204
        %v206 = vadd.f32 %v195, %v196
        %207 = vadd.xlane.f32.xlu0 %v206
        %v208 = vpop.xlane.xlu0 %207
        %v209 = vmul.f32 %v199, 0.00390625
        %v210 = vmul.f32 %v202, 0.00390625
        %v211 = vmul.f32 %v205, 0.00390625
        %v212 = vmul.f32 %v208, 0.00390625
        %v213 = vld [vmem:[%s1] sm:$0x3]
        %v218 = vlaneseq
        %v219 = vand.u32 %v218, 127
        %v220 = vlaneseq
        %v221 = vshrl.u32 %v220, 7
        %v222 = vsub.s32 %v219, %v221
        %v223 = vrot.slane %v209, %v222
        %v224 = vadd.s32 %v219, 4294967288
        %v225 = vlaneseq
        %v226 = vshrl.u32 %v225, 7
        %v227 = vsub.s32 %v224, %v226
        %v228 = vrot.slane %v210, %v227
        %vm229 = vcmask 130112
        %v230 = vsel %vm229, %v228, %v223
        %v231 = vadd.s32 %v219, 4294967280
        %v232 = vlaneseq
        %v233 = vshrl.u32 %v232, 7
        %v234 = vsub.s32 %v231, %v233
        %v235 = vrot.slane %v211, %v234
        %vm236 = vcmask 195712
        %v237 = vsel %vm236, %v235, %v230
        %v238 = vadd.s32 %v219, 4294967272
        %v239 = vlaneseq
        %v240 = vshrl.u32 %v239, 7
        %v241 = vsub.s32 %v238, %v240
        %v242 = vrot.slane %v212, %v241
        %vm243 = vcmask 261312
        %v244 = vsel %vm243, %v242, %v237
        %vm245 = vcmask 261120
        %v246 = vsel %vm245, %v244, 0
        %v249 = vsel %vm245, %v213, 0
        %251 = vmatprep.subr.mxu0 0.0
        %252 = vmatpush1.xpose.msra.mxu0 %v249
        %253 = vmatprep.subr.mxu0 0.0
        %254 = vmatpush1.xpose.msra.mxu0 0.0
        %255 = vmatprep.subr.mxu0 0.0
        %256 = vmatpush1.xpose.msra.mxu0 0.0
        %257 = vmatprep.subr.mxu0 0.0
        %258 = vmatpush1.xpose.msra.mxu0 0.0
        %259 = vmatprep.subr.mxu0 0.0
        %260 = vmatpush1.xpose.msra.mxu0 0.0
        %261 = vmatprep.subr.mxu0 0.0
        %262 = vmatpush1.xpose.msra.mxu0 0.0
        %263 = vmatprep.subr.mxu0 0.0
        %264 = vmatpush1.xpose.msra.mxu0 0.0
        %265 = vmatprep.subr.mxu0 0.0
        %266 = vmatpush1.xpose.msra.mxu0 0.0
        %267 = vmatprep.subr.mxu0 0.0
        %268 = vmatpush1.xpose.msra.mxu0 0.0
        %269 = vmatprep.subr.mxu0 0.0
        %270 = vmatpush1.xpose.msra.mxu0 0.0
        %271 = vmatprep.subr.mxu0 0.0
        %272 = vmatpush1.xpose.msra.mxu0 0.0
        %273 = vmatprep.subr.mxu0 0.0
        %274 = vmatpush1.xpose.msra.mxu0 0.0
        %275 = vmatprep.subr.mxu0 0.0
        %276 = vmatpush1.xpose.msra.mxu0 0.0
        %277 = vmatprep.subr.mxu0 0.0
        %278 = vmatpush1.xpose.msra.mxu0 0.0
        %279 = vmatprep.subr.mxu0 0.0
        %280 = vmatpush1.xpose.msra.mxu0 0.0
        %281 = vmatprep.subr.mxu0 0.0
        %282 = vmatpush1.xpose.msra.mxu0 0.0
        %283 = vmatprep.subr.mxu0 0.0
        %284 = vmatpush1.xpose.msra.mxu0 0.0
        %285 = vmatprep.subr.mxu0 0.0
        %286 = vmatpush1.xpose.msra.mxu0 0.0
        %287 = vmatprep.subr.mxu0 0.0
        %288 = vmatpush1.xpose.msra.mxu0 0.0
        %289 = vmatprep.subr.mxu0 0.0
        %290 = vmatpush1.xpose.msra.mxu0 0.0
        %291 = vmatprep.subr.mxu0 0.0
        %292 = vmatpush1.xpose.msra.mxu0 0.0
        %293 = vmatprep.subr.mxu0 0.0
        %294 = vmatpush1.xpose.msra.mxu0 0.0
        %295 = vmatprep.subr.mxu0 0.0
        %296 = vmatpush1.xpose.msra.mxu0 0.0
        %297 = vmatprep.subr.mxu0 0.0
        %298 = vmatpush1.xpose.msra.mxu0 0.0
        %299 = vmatprep.subr.mxu0 0.0
        %300 = vmatpush1.xpose.msra.mxu0 0.0
        %301 = vmatprep.subr.mxu0 0.0
        %302 = vmatpush1.xpose.msra.mxu0 0.0
        %303 = vmatprep.subr.mxu0 0.0
        %304 = vmatpush1.xpose.msra.mxu0 0.0
        %305 = vmatprep.subr.mxu0 0.0
        %306 = vmatpush1.xpose.msra.mxu0 0.0
        %307 = vmatprep.subr.mxu0 0.0
        %308 = vmatpush1.xpose.msra.mxu0 0.0
        %309 = vmatprep.subr.mxu0 0.0
        %310 = vmatpush1.xpose.msra.mxu0 0.0
        %311 = vmatprep.subr.mxu0 0.0
        %312 = vmatpush1.xpose.msra.mxu0 0.0
        %313 = vmatprep.subr.mxu0 0.0
        %314 = vmatpush1.xpose.msra.mxu0 0.0
        %315 = vmatprep.mubr.f32.mxu0 0.0
        %316 = vmatmul.mubr.f32.gmra.mrb[0].mxu0 %v246
        %v317 = vpop.f32.mrb[0].mxu0
        %v318 = vadd.f32 0.0, %v317
        %v319 = vpop.f32.mrb[0].mxu0
        %320 = vdwg.mxu0
        %v321 = vmax.f32 %v318, 0.0
        %v322 = vld [vmem:[%s2] sm:$0xff]
        %v323 = vld [vmem:[%s2 + $0x8] sm:$0xff]
        %v324 = vld [vmem:[%s2 + $0x10] sm:$0xff]
        %v325 = vld [vmem:[%s2 + $0x18] sm:$0xff]
        %vm326 = vcmask 15360
        %v328 = vsel %vm326, %v321, 0
        %v331 = vsel %vm326, %v322, 0
        %v334 = vsel %vm326, %v323, 0
        %v337 = vsel %vm326, %v324, 0
        %v340 = vsel %vm326, %v325, 0
        %342 = vmatprep.subr.mxu0 0.0
        %343 = vmatpush1.xpose.msra.mxu0 %v331
        %344 = vmatprep.subr.mxu0 0.0
        %345 = vmatpush1.xpose.msra.mxu0 %v334
        %346 = vmatprep.subr.mxu0 0.0
        %347 = vmatpush1.xpose.msra.mxu0 %v337
        %348 = vmatprep.subr.mxu0 0.0
        %349 = vmatpush1.xpose.msra.mxu0 %v340
        %350 = vmatprep.subr.mxu0 0.0
        %351 = vmatpush1.xpose.msra.mxu0 0.0
        %352 = vmatprep.subr.mxu0 0.0
        %353 = vmatpush1.xpose.msra.mxu0 0.0
        %354 = vmatprep.subr.mxu0 0.0
        %355 = vmatpush1.xpose.msra.mxu0 0.0
        %356 = vmatprep.subr.mxu0 0.0
        %357 = vmatpush1.xpose.msra.mxu0 0.0
        %358 = vmatprep.subr.mxu0 0.0
        %359 = vmatpush1.xpose.msra.mxu0 0.0
        %360 = vmatprep.subr.mxu0 0.0
        %361 = vmatpush1.xpose.msra.mxu0 0.0
        %362 = vmatprep.subr.mxu0 0.0
        %363 = vmatpush1.xpose.msra.mxu0 0.0
        %364 = vmatprep.subr.mxu0 0.0
        %365 = vmatpush1.xpose.msra.mxu0 0.0
        %366 = vmatprep.subr.mxu0 0.0
        %367 = vmatpush1.xpose.msra.mxu0 0.0
        %368 = vmatprep.subr.mxu0 0.0
        %369 = vmatpush1.xpose.msra.mxu0 0.0
        %370 = vmatprep.subr.mxu0 0.0
        %371 = vmatpush1.xpose.msra.mxu0 0.0
        %372 = vmatprep.subr.mxu0 0.0
        %373 = vmatpush1.xpose.msra.mxu0 0.0
        %374 = vmatprep.subr.mxu0 0.0
        %375 = vmatpush1.xpose.msra.mxu0 0.0
        %376 = vmatprep.subr.mxu0 0.0
        %377 = vmatpush1.xpose.msra.mxu0 0.0
        %378 = vmatprep.subr.mxu0 0.0
        %379 = vmatpush1.xpose.msra.mxu0 0.0
        %380 = vmatprep.subr.mxu0 0.0
        %381 = vmatpush1.xpose.msra.mxu0 0.0
        %382 = vmatprep.subr.mxu0 0.0
        %383 = vmatpush1.xpose.msra.mxu0 0.0
        %384 = vmatprep.subr.mxu0 0.0
        %385 = vmatpush1.xpose.msra.mxu0 0.0
        %386 = vmatprep.subr.mxu0 0.0
        %387 = vmatpush1.xpose.msra.mxu0 0.0
        %388 = vmatprep.subr.mxu0 0.0
        %389 = vmatpush1.xpose.msra.mxu0 0.0
        %390 = vmatprep.subr.mxu0 0.0
        %391 = vmatpush1.xpose.msra.mxu0 0.0
        %392 = vmatprep.subr.mxu0 0.0
        %393 = vmatpush1.xpose.msra.mxu0 0.0
        %394 = vmatprep.subr.mxu0 0.0
        %395 = vmatpush1.xpose.msra.mxu0 0.0
        %396 = vmatprep.subr.mxu0 0.0
        %397 = vmatpush1.xpose.msra.mxu0 0.0
        %398 = vmatprep.subr.mxu0 0.0
        %399 = vmatpush1.xpose.msra.mxu0 0.0
        %400 = vmatprep.subr.mxu0 0.0
        %401 = vmatpush1.xpose.msra.mxu0 0.0
        %402 = vmatprep.subr.mxu0 0.0
        %403 = vmatpush1.xpose.msra.mxu0 0.0
        %404 = vmatprep.subr.mxu0 0.0
        %405 = vmatpush1.xpose.msra.mxu0 0.0
        %406 = vmatprep.mubr.f32.mxu0 0.0
        %407 = vmatmul.mubr.f32.gmra.mrb[0].mxu0 %v328
        %v408 = vpop.f32.mrb[0].mxu0
        %v409 = vadd.f32 0.0, %v408
        %v410 = vpop.f32.mrb[0].mxu0
        %411 = vdwg.mxu0
        %v412 = vxor.u32 %v409, 2147483648
        %v413 = vmul.f32 %v412, 1.442695
        %v414 = vpow.pop %v413
        %v415 = vadd.f32 %v414, 1.0
        %v416 = vrcp.pop %v415
        %v417 = vmul.f32 1.0, %v416
        %v418 = vlaneseq
        %v419 = vshrl.u32 %v418, 7
        %v420 = vsub.s32 0, %v419
        %v421 = vrot.slane %v417, %v420
        %423 = vbcast.lane.b32.xlu0 %v421, 256
        %v424 = vpop.permute.xlu0 %423
        %s426 = sor.u32 256, 8
        %427 = vbcast.lane.b32.xlu0 %v421, %s426
        %v428 = vpop.permute.xlu0 %427
        %s430 = sor.u32 256, 16
        %431 = vbcast.lane.b32.xlu0 %v421, %s430
        %v432 = vpop.permute.xlu0 %431
        %s434 = sor.u32 256, 24
        %435 = vbcast.lane.b32.xlu0 %v421, %s434
        %v436 = vpop.permute.xlu0 %435
        %v437 = vmul.f32 %v189, %v424
        %v438 = vmul.f32 %v190, %v424
        %v439 = vmul.f32 %v191, %v428
        %v440 = vmul.f32 %v192, %v428
        %v441 = vmul.f32 %v193, %v432
        %v442 = vmul.f32 %v194, %v432
        %v443 = vmul.f32 %v195, %v436
        %v444 = vmul.f32 %v196, %v436
        %445 = vst [vmem:[%s188] sm:$0xff] %v437
        %446 = vst [vmem:[%s188 + $0x8] sm:$0xff] %v438
        %447 = vst [vmem:[%s188 + $0x10] sm:$0xff] %v439
        %448 = vst [vmem:[%s188 + $0x18] sm:$0xff] %v440
        %449 = vst [vmem:[%s188 + $0x20] sm:$0xff] %v441
        %450 = vst [vmem:[%s188 + $0x28] sm:$0xff] %v442
        %451 = vst [vmem:[%s188 + $0x30] sm:$0xff] %v443
        %452 = vst [vmem:[%s188 + $0x38] sm:$0xff] %v444
        %s453 = sand.u32 %s96, 1
        %s454 = scalar_lea.sflag [#allocation4], %s453
        %s455 = sand.u32 %s96, 1
        %s456 = smul.addr %s455, 64
        %s457 = scalar_lea.vmem [#allocation5], %s456
        // Predicated region
        $region37: #{tpu_custom_call.1} parent=31 // pred_check
          %p458 = pneg %p106
        $region38: #{tpu_custom_call.1} parent=31 // pred_check_branch
          %460 = sbr.rel (%p458) target = $region40
        $region39: #{tpu_custom_call.1} parent=31 // pred_region
          %s462 = ssub.s32 1024, 1024
          %463 = vsyncadd %s454, %s462
          %s464 = smul.addr %s20, 8
          %s465 = smul.addr %s464, 128
          %s466 = scalar_lea.hbm %s3, %s465
          %s467 = sshll.u32 %s457, 4
          %s468 = int_to_ptr.vmem [resolvable:$true] %s467
          %473 = dma.vmem_to_hbm [thread:$0]  %s468, 1024, %s466, %s454, 256, 256, 16
        $region40: #{tpu_custom_call.1} parent=31 // pred_fallthru
          _
      $region32: #{tpu_custom_call.1} parent=5 // pred_fallthru
        _
      %p474 = scmp.le.s32.totalorder 2, %s15
      // Predicated region
      $region41: #{tpu_custom_call.1} parent=5 // pred_check
        %p475 = pneg %p474
      $region42: #{tpu_custom_call.1} parent=5 // pred_check_branch
        %477 = sbr.rel (%p475) target = $region44
      $region43: #{tpu_custom_call.1} parent=5 // pred_region
        %s478 = ssub.s32 %s15, 2
        // Predicated region
        $region45: #{tpu_custom_call.1} parent=43 // pred_check
          %p479 = pneg %p112
        $region46: #{tpu_custom_call.1} parent=43 // pred_check_branch
          %481 = sbr.rel (%p479) target = $region48
        $region47: #{tpu_custom_call.1} parent=43 // pred_region
          %s482 = sand.u32 %s97, 1
          %s483 = scalar_lea.sflag [#allocation4], %s482
          %s484 = sand.u32 %s97, 1
          %s485 = smul.addr %s484, 64
          %s486 = scalar_lea.vmem [#allocation5], %s485
          %487 = dma.done %s483, 1024
        $region48: #{tpu_custom_call.1} parent=43 // pred_fallthru
          _
      $region44: #{tpu_custom_call.1} parent=5 // pred_fallthru
        _
    $region6: #{tpu_custom_call.1} parent=1 // loop_footer
      %s19 = sadd.s32 1, %s15
    $region7: #{tpu_custom_call.1} parent=1 // loop_footer_branch
      %14 = sbr.rel target = $region3
    $region8: #{tpu_custom_call.1} parent=1 // loop_exit
      _
    %488 = vsyncpa [#allocation3], 1
    %s489 = scalar_lea.sflag [#allocation3], 1
    %490 = vsyncpa %s489, 1
    %491 = vsyncpa [#allocation4], 1
    %s492 = scalar_lea.sflag [#allocation4], 1
    %493 = vsyncpa %s492, 1

</llo_original>
